<compile_context>
chip_gen: v6e
topology: v6e:2x2x1
jax: 0.10.0
libtpu: 0.0.40
codegen_flags: <defaults>
</compile_context>

<pallas_src>
import jax
import jax.numpy as jnp
import numpy as np
from jax import lax
from jax.experimental import pallas as pl
from jax.experimental.pallas import tpu as pltpu

EPS = 1e-5


def _build_kernel(L):
    """Kernel closure over the static per-sample length L."""

    def kernel(x_ref, w1_ref, w2_ref, g1_ref, b1_ref, g2_ref, b2_ref,
               scale_ref, out_ref):
        Cout, NL = out_ref.shape
        inv_nl = 1.0 / NL  # static python float

        # Edge-validity masks generated in-kernel (a few VPU ops, no DMA).
        pos = lax.broadcasted_iota(jnp.int32, (1, NL), 1) % L
        lmask = pos != 0          # left neighbour exists (l > 0)
        rmask = pos != (L - 1)    # right neighbour exists (l < L - 1)

        def taps_bf16(v):
            # v: (C, NL) f32.  Taps via XLU lane rotations + edge masks; cast
            # to bf16 only at the MXU boundary (elementwise math stays f32).
            left = jnp.where(lmask, pltpu.roll(v, shift=1, axis=1), 0.0)
            right = jnp.where(rmask, pltpu.roll(v, shift=NL - 1, axis=1), 0.0)
            return (left.astype(jnp.bfloat16),
                    v.astype(jnp.bfloat16),
                    right.astype(jnp.bfloat16))

        def conv3(w_ref, v):
            # Three accumulated K=C matmuls; no (3*C, NL) slab materialized.
            l, c, r = taps_bf16(v)
            acc = jnp.dot(w_ref[0], l, preferred_element_type=jnp.float32)
            acc += jnp.dot(w_ref[1], c, preferred_element_type=jnp.float32)
            acc += jnp.dot(w_ref[2], r, preferred_element_type=jnp.float32)
            return acc

        def bn(h, g_ref, b_ref):
            # Training-mode per-channel batch stats (biased variance),
            # two-pass variance for numerical safety, fused scale+shift.
            mean = jnp.sum(h, axis=-1, keepdims=True) * inv_nl
            d = h - mean
            var = jnp.sum(d * d, axis=-1, keepdims=True) * inv_nl
            scl = g_ref[...] * lax.rsqrt(var + EPS)
            return d * scl + b_ref[...]

        x = x_ref[...]                                               # (Cin, NL) f32
        h = jnp.maximum(bn(conv3(w1_ref, x), g1_ref, b1_ref), 0.0)   # conv1+bn1+relu
        h2 = bn(conv3(w2_ref, h), g2_ref, b2_ref)                    # conv2+bn2
        # attention = Identity, downsample = None -> residual is the raw input.
        h2 = h2 + x * scale_ref[0]                                   # SMEM scalar
        out_ref[...] = jnp.maximum(h2, 0.0)

    return kernel


def _vmem_budget_bytes():
    try:
        cap = int(pltpu.get_tpu_info().vmem_capacity_bytes)
    except Exception:
        cap = 64 * 1024 * 1024   # conservative fallback (v7x per-TC VMEM)
    # Leave headroom for Mosaic double-buffering / internal scratch:
    # ~48 MiB on v7x (64 MiB physical), capped at ~96-100 MiB on v5e/v6e.
    return min(int(cap * 3 // 4), 100 * 1024 * 1024)


def attn_res_block1d_cl(x_cl, w1, w2, g1, b1, g2, b2, scale, L):
    """Core entry in lane-dense (C, N*L) layout (chainable without transposes)."""
    Cin, NL = x_cl.shape
    Cout = w1.shape[0]
    assert Cin == Cout, "residual add requires in_channels == out_channels"
    assert NL % L == 0

    # Per-tap weight stacks for the MXU, bf16, kernel-tap k along axis 0.
    w1s = jnp.transpose(w1, (2, 0, 1)).astype(jnp.bfloat16)   # (3, Cout, Cin)
    w2s = jnp.transpose(w2, (2, 0, 1)).astype(jnp.bfloat16)   # (3, Cout, Cout)

    g1c = g1.reshape(Cout, 1).astype(jnp.float32)
    b1c = b1.reshape(Cout, 1).astype(jnp.float32)
    g2c = g2.reshape(Cout, 1).astype(jnp.float32)
    b2c = b2.reshape(Cout, 1).astype(jnp.float32)
    sc = scale.reshape(1).astype(jnp.float32)                  # SMEM scalar

    # ---- generation-aware VMEM budget (gridless, everything resident) ------
    io_bytes = (4 * (Cin * NL + Cout * NL)                     # x in, out
                + 2 * 3 * (Cout * Cin + Cout * Cout)           # bf16 weights
                + 4 * 4 * Cout + 4)                            # bn params, scale
    live_tmp_bytes = (4 * 5 + 2 * 4) * max(Cin, Cout) * NL     # taps/acc headroom
    budget = _vmem_budget_bytes()
    assert 2 * io_bytes + live_tmp_bytes < budget, (
        "shape too large for the gridless all-in-VMEM design; "
        "add an NL grid with reduce-then-apply BN")

    flops = (2 * Cout * NL * 3 * Cin       # conv1
             + 2 * Cout * NL * 3 * Cout    # conv2
             + 14 * Cout * NL)             # bn/relu/residual elementwise
    cost = pl.CostEstimate(flops=int(flops), transcendentals=int(2 * Cout),
                           bytes_accessed=int(io_bytes))

    vmem = pl.BlockSpec(memory_space=pltpu.MemorySpace.VMEM)
    smem = pl.BlockSpec(memory_space=pltpu.MemorySpace.SMEM)

    out_cl = pl.pallas_call(
        _build_kernel(L),
        out_shape=jax.ShapeDtypeStruct((Cout, NL), jnp.float32),
        in_specs=[vmem] * 7 + [smem],
        out_specs=vmem,
        compiler_params=pltpu.CompilerParams(vmem_limit_bytes=budget),
        cost_estimate=cost,
    )(x_cl.astype(jnp.float32), w1s, w2s, g1c, b1c, g2c, b2c, sc)
    return out_cl


def attn_res_block1d(x_ncl, w1, w2, g1, b1, g2, b2, scale):
    """x_ncl: (N, C_in, L) fp32.  Returns (out, residual), both (N, C_out, L)."""
    N, Cin, L = x_ncl.shape
    Cout = w1.shape[0]
    # Wrapper-side layout plumbing only at the block-stack boundary; use
    # attn_res_block1d_cl directly to chain blocks in (C, N*L) layout.
    x_cl = jnp.transpose(x_ncl, (1, 0, 2)).reshape(Cin, N * L).astype(jnp.float32)
    out_cl = attn_res_block1d_cl(x_cl, w1, w2, g1, b1, g2, b2, scale, L)
    out = jnp.transpose(out_cl.reshape(Cout, N, L), (1, 0, 2))       # back to NCL
    residual = x_ncl                                                 # Identity attention
    return out, residual


def ref_forward(x_ncl, w1, w2, g1, b1, g2, b2, scale):
    """Pure-JAX f32 reference matching the PyTorch forward (training-mode BN)."""
    def conv1d(x, w):
        return lax.conv_general_dilated(
            x, w, window_strides=(1,), padding=((1, 1),),
            dimension_numbers=('NCH', 'OIH', 'NCH'))

    def bn(h, g, b):
        mean = h.mean(axis=(0, 2), keepdims=True)
        var = ((h - mean) ** 2).mean(axis=(0, 2), keepdims=True)
        return ((h - mean) / jnp.sqrt(var + EPS)) * g.reshape(1, -1, 1) \
            + b.reshape(1, -1, 1)

    h = conv1d(x_ncl, w1)
    h = bn(h, g1, b1)
    h = jnp.maximum(h, 0.0)
    h = conv1d(h, w2)
    h = bn(h, g2, b2)
    h = h + x_ncl * scale[0]
    return jnp.maximum(h, 0.0), x_ncl


if __name__ == "__main__":
    # N*L = 128 -> lane-dense output; residual path requires Cin == Cout
    N, Cin, Cout, L = 2, 8, 8, 64

    key = jax.random.PRNGKey(0)
    k_x, k_w1, k_w2 = jax.random.split(key, 3)

    x = jax.random.normal(k_x, (N, Cin, L), dtype=jnp.float32)
    # Conv1d weights: (out_channels, in_channels, kernel); bias=False (norm=True)
    w1 = jax.random.normal(k_w1, (Cout, Cin, 3), dtype=jnp.float32) * 0.2
    w2 = jax.random.normal(k_w2, (Cout, Cout, 3), dtype=jnp.float32) * 0.2
    # BatchNorm1d default init: gamma=1, beta=0
    g1 = jnp.ones((Cout,), jnp.float32)
    b1 = jnp.zeros((Cout,), jnp.float32)
    g2 = jnp.ones((Cout,), jnp.float32)
    b2 = jnp.zeros((Cout,), jnp.float32)
    # residual_scale parameter initialized to [1.0]
    scale = jnp.array([1.0], jnp.float32)

    out, residual = attn_res_block1d(x, w1, w2, g1, b1, g2, b2, scale)
    out = jax.block_until_ready(out)
    residual = jax.block_until_ready(residual)

    out_ref, res_ref = ref_forward(x, w1, w2, g1, b1, g2, b2, scale)
    # Tolerance reflects bf16 MXU operands (two cascaded convs + BN rescale);
    # elementwise path (BN/ReLU/residual) is f32.
    np.testing.assert_allclose(np.asarray(out), np.asarray(out_ref),
                               rtol=5e-2, atol=5e-2)
    np.testing.assert_allclose(np.asarray(residual), np.asarray(res_ref),
                               rtol=1e-6, atol=1e-6)

    print("KERNEL_OK")
</pallas_src>

<mosaic_0001>
module attributes {stable_mosaic.version = 11 : i64} {
  func.func @kernel(%arg0: memref<8x128xf32, #tpu.memory_space<vmem>>, %arg1: memref<3x8x8xbf16, #tpu.memory_space<vmem>>, %arg2: memref<3x8x8xbf16, #tpu.memory_space<vmem>>, %arg3: memref<8x1xf32, #tpu.memory_space<vmem>>, %arg4: memref<8x1xf32, #tpu.memory_space<vmem>>, %arg5: memref<8x1xf32, #tpu.memory_space<vmem>>, %arg6: memref<8x1xf32, #tpu.memory_space<vmem>>, %arg7: memref<1xf32, #tpu.memory_space<smem>>, %arg8: memref<8x128xf32, #tpu.memory_space<vmem>>) attributes {dimension_semantics = [], scalar_prefetch = 0 : i64, scratch_operands = 0 : i64, tpu.core_type = #tpu.core_type<tc>} {
    %0 = tpu.iota {dimensions = array<i32: 1>} : vector<1x128xi32>
    %c64_i32 = arith.constant 64 : i32
    %c0_i32 = arith.constant 0 : i32
    %1 = arith.cmpi eq, %c64_i32, %c0_i32 : i32
    %c1_i32 = arith.constant 1 : i32
    %2 = arith.select %1, %c1_i32, %c64_i32 : i32
    %3 = vector.broadcast %2 : i32 to vector<1x128xi32>
    %4 = arith.remsi %0, %3 : vector<1x128xi32>
    %c0_i32_0 = arith.constant 0 : i32
    %5 = vector.broadcast %c0_i32_0 : i32 to vector<1x128xi32>
    %6 = arith.cmpi ne, %4, %5 : vector<1x128xi32>
    %c0_i32_1 = arith.constant 0 : i32
    %7 = vector.broadcast %c0_i32_1 : i32 to vector<1x128xi32>
    %8 = arith.cmpi slt, %4, %7 : vector<1x128xi32>
    %c0_i32_2 = arith.constant 0 : i32
    %9 = arith.cmpi slt, %2, %c0_i32_2 : i32
    %10 = vector.broadcast %9 : i1 to vector<1x128xi1>
    %11 = vector.broadcast %10 : vector<1x128xi1> to vector<1x128xi1>
    %12 = arith.xori %8, %11 : vector<1x128xi1>
    %13 = arith.andi %12, %6 : vector<1x128xi1>
    %14 = vector.broadcast %2 : i32 to vector<1x128xi32>
    %15 = arith.addi %4, %14 : vector<1x128xi32>
    %16 = arith.select %13, %15, %4 : vector<1x128xi1>, vector<1x128xi32>
    %c0_i32_3 = arith.constant 0 : i32
    %17 = vector.broadcast %c0_i32_3 : i32 to vector<1x128xi32>
    %18 = arith.cmpi ne, %16, %17 : vector<1x128xi32>
    %c63_i32 = arith.constant 63 : i32
    %19 = vector.broadcast %c63_i32 : i32 to vector<1x128xi32>
    %20 = arith.cmpi ne, %16, %19 : vector<1x128xi32>
    %c0 = arith.constant 0 : index
    %c0_4 = arith.constant 0 : index
    %21 = vector.load %arg0[%c0, %c0_4] : memref<8x128xf32, #tpu.memory_space<vmem>>, vector<8x128xf32>
    %c1_i32_5 = arith.constant 1 : i32
    %22 = tpu.dynamic_rotate %21 by %c1_i32_5 dim 1 : vector<8x128xf32>, i32 -> vector<8x128xf32>
    %cst = arith.constant 0.000000e+00 : f32
    %23 = vector.shape_cast %18 : vector<1x128xi1> to vector<1x128xi1>
    %24 = vector.broadcast %23 : vector<1x128xi1> to vector<8x128xi1>
    %25 = vector.broadcast %cst : f32 to vector<8x128xf32>
    %26 = arith.select %24, %22, %25 : vector<8x128xi1>, vector<8x128xf32>
    %c127_i32 = arith.constant 127 : i32
    %27 = tpu.dynamic_rotate %21 by %c127_i32 dim 1 : vector<8x128xf32>, i32 -> vector<8x128xf32>
    %cst_6 = arith.constant 0.000000e+00 : f32
    %28 = vector.shape_cast %20 : vector<1x128xi1> to vector<1x128xi1>
    %29 = vector.broadcast %28 : vector<1x128xi1> to vector<8x128xi1>
    %30 = vector.broadcast %cst_6 : f32 to vector<8x128xf32>
    %31 = arith.select %29, %27, %30 : vector<8x128xi1>, vector<8x128xf32>
    %32 = arith.truncf %26 : vector<8x128xf32> to vector<8x128xbf16>
    %33 = arith.truncf %21 : vector<8x128xf32> to vector<8x128xbf16>
    %34 = arith.truncf %31 : vector<8x128xf32> to vector<8x128xbf16>
    %c0_7 = arith.constant 0 : index
    %c0_8 = arith.constant 0 : index
    %c0_9 = arith.constant 0 : index
    %35 = vector.load %arg1[%c0_7, %c0_8, %c0_9] : memref<3x8x8xbf16, #tpu.memory_space<vmem>>, vector<1x8x8xbf16>
    %36 = vector.shape_cast %35 : vector<1x8x8xbf16> to vector<8x8xbf16>
    %cst_10 = arith.constant dense<0.000000e+00> : vector<8x128xf32>
    %37 = tpu.matmul %36, %32, %cst_10 {dimension_numbers = #tpu.dot_dimension_numbers<[1], [0], [0], [1], [0, 0, 1, 1], [], []>} : vector<8x8xbf16>, vector<8x128xbf16>, vector<8x128xf32> -> vector<8x128xf32>
    %c1 = arith.constant 1 : index
    %c0_11 = arith.constant 0 : index
    %c0_12 = arith.constant 0 : index
    %38 = vector.load %arg1[%c1, %c0_11, %c0_12] : memref<3x8x8xbf16, #tpu.memory_space<vmem>>, vector<1x8x8xbf16>
    %39 = vector.shape_cast %38 : vector<1x8x8xbf16> to vector<8x8xbf16>
    %cst_13 = arith.constant dense<0.000000e+00> : vector<8x128xf32>
    %40 = tpu.matmul %39, %33, %cst_13 {dimension_numbers = #tpu.dot_dimension_numbers<[1], [0], [0], [1], [0, 0, 1, 1], [], []>} : vector<8x8xbf16>, vector<8x128xbf16>, vector<8x128xf32> -> vector<8x128xf32>
    %41 = arith.addf %37, %40 : vector<8x128xf32>
    %c2 = arith.constant 2 : index
    %c0_14 = arith.constant 0 : index
    %c0_15 = arith.constant 0 : index
    %42 = vector.load %arg1[%c2, %c0_14, %c0_15] : memref<3x8x8xbf16, #tpu.memory_space<vmem>>, vector<1x8x8xbf16>
    %43 = vector.shape_cast %42 : vector<1x8x8xbf16> to vector<8x8xbf16>
    %cst_16 = arith.constant dense<0.000000e+00> : vector<8x128xf32>
    %44 = tpu.matmul %43, %34, %cst_16 {dimension_numbers = #tpu.dot_dimension_numbers<[1], [0], [0], [1], [0, 0, 1, 1], [], []>} : vector<8x8xbf16>, vector<8x128xbf16>, vector<8x128xf32> -> vector<8x128xf32>
    %45 = arith.addf %41, %44 : vector<8x128xf32>
    %cst_17 = arith.constant dense<0.000000e+00> : vector<8xf32>
    %46 = vector.multi_reduction <add>, %45, %cst_17 [1] : vector<8x128xf32> to vector<8xf32>
    %47 = vector.shape_cast %46 : vector<8xf32> to vector<8x1xf32>
    %cst_18 = arith.constant 7.812500e-03 : f32
    %48 = vector.broadcast %cst_18 : f32 to vector<8x1xf32>
    %49 = arith.mulf %47, %48 : vector<8x1xf32>
    %50 = vector.broadcast %49 : vector<8x1xf32> to vector<8x128xf32>
    %51 = arith.subf %45, %50 : vector<8x128xf32>
    %52 = arith.mulf %51, %51 : vector<8x128xf32>
    %cst_19 = arith.constant dense<0.000000e+00> : vector<8xf32>
    %53 = vector.multi_reduction <add>, %52, %cst_19 [1] : vector<8x128xf32> to vector<8xf32>
    %54 = vector.shape_cast %53 : vector<8xf32> to vector<8x1xf32>
    %cst_20 = arith.constant 7.812500e-03 : f32
    %55 = vector.broadcast %cst_20 : f32 to vector<8x1xf32>
    %56 = arith.mulf %54, %55 : vector<8x1xf32>
    %c0_21 = arith.constant 0 : index
    %c0_22 = arith.constant 0 : index
    %57 = vector.load %arg3[%c0_21, %c0_22] : memref<8x1xf32, #tpu.memory_space<vmem>>, vector<8x1xf32>
    %cst_23 = arith.constant 9.99999974E-6 : f32
    %58 = vector.broadcast %cst_23 : f32 to vector<8x1xf32>
    %59 = arith.addf %56, %58 : vector<8x1xf32>
    %60 = math.rsqrt %59 : vector<8x1xf32>
    %61 = arith.mulf %57, %60 : vector<8x1xf32>
    %62 = vector.broadcast %61 : vector<8x1xf32> to vector<8x128xf32>
    %63 = arith.mulf %51, %62 : vector<8x128xf32>
    %c0_24 = arith.constant 0 : index
    %c0_25 = arith.constant 0 : index
    %64 = vector.load %arg4[%c0_24, %c0_25] : memref<8x1xf32, #tpu.memory_space<vmem>>, vector<8x1xf32>
    %65 = vector.broadcast %64 : vector<8x1xf32> to vector<8x128xf32>
    %66 = arith.addf %63, %65 : vector<8x128xf32>
    %cst_26 = arith.constant 0.000000e+00 : f32
    %67 = vector.broadcast %cst_26 : f32 to vector<8x128xf32>
    %68 = arith.maximumf %66, %67 : vector<8x128xf32>
    %c1_i32_27 = arith.constant 1 : i32
    %69 = tpu.dynamic_rotate %68 by %c1_i32_27 dim 1 : vector<8x128xf32>, i32 -> vector<8x128xf32>
    %cst_28 = arith.constant 0.000000e+00 : f32
    %70 = vector.shape_cast %18 : vector<1x128xi1> to vector<1x128xi1>
    %71 = vector.broadcast %70 : vector<1x128xi1> to vector<8x128xi1>
    %72 = vector.broadcast %cst_28 : f32 to vector<8x128xf32>
    %73 = arith.select %71, %69, %72 : vector<8x128xi1>, vector<8x128xf32>
    %c127_i32_29 = arith.constant 127 : i32
    %74 = tpu.dynamic_rotate %68 by %c127_i32_29 dim 1 : vector<8x128xf32>, i32 -> vector<8x128xf32>
    %cst_30 = arith.constant 0.000000e+00 : f32
    %75 = vector.shape_cast %20 : vector<1x128xi1> to vector<1x128xi1>
    %76 = vector.broadcast %75 : vector<1x128xi1> to vector<8x128xi1>
    %77 = vector.broadcast %cst_30 : f32 to vector<8x128xf32>
    %78 = arith.select %76, %74, %77 : vector<8x128xi1>, vector<8x128xf32>
    %79 = arith.truncf %73 : vector<8x128xf32> to vector<8x128xbf16>
    %80 = arith.truncf %68 : vector<8x128xf32> to vector<8x128xbf16>
    %81 = arith.truncf %78 : vector<8x128xf32> to vector<8x128xbf16>
    %c0_31 = arith.constant 0 : index
    %c0_32 = arith.constant 0 : index
    %c0_33 = arith.constant 0 : index
    %82 = vector.load %arg2[%c0_31, %c0_32, %c0_33] : memref<3x8x8xbf16, #tpu.memory_space<vmem>>, vector<1x8x8xbf16>
    %83 = vector.shape_cast %82 : vector<1x8x8xbf16> to vector<8x8xbf16>
    %cst_34 = arith.constant dense<0.000000e+00> : vector<8x128xf32>
    %84 = tpu.matmul %83, %79, %cst_34 {dimension_numbers = #tpu.dot_dimension_numbers<[1], [0], [0], [1], [0, 0, 1, 1], [], []>} : vector<8x8xbf16>, vector<8x128xbf16>, vector<8x128xf32> -> vector<8x128xf32>
    %c1_35 = arith.constant 1 : index
    %c0_36 = arith.constant 0 : index
    %c0_37 = arith.constant 0 : index
    %85 = vector.load %arg2[%c1_35, %c0_36, %c0_37] : memref<3x8x8xbf16, #tpu.memory_space<vmem>>, vector<1x8x8xbf16>
    %86 = vector.shape_cast %85 : vector<1x8x8xbf16> to vector<8x8xbf16>
    %cst_38 = arith.constant dense<0.000000e+00> : vector<8x128xf32>
    %87 = tpu.matmul %86, %80, %cst_38 {dimension_numbers = #tpu.dot_dimension_numbers<[1], [0], [0], [1], [0, 0, 1, 1], [], []>} : vector<8x8xbf16>, vector<8x128xbf16>, vector<8x128xf32> -> vector<8x128xf32>
    %88 = arith.addf %84, %87 : vector<8x128xf32>
    %c2_39 = arith.constant 2 : index
    %c0_40 = arith.constant 0 : index
    %c0_41 = arith.constant 0 : index
    %89 = vector.load %arg2[%c2_39, %c0_40, %c0_41] : memref<3x8x8xbf16, #tpu.memory_space<vmem>>, vector<1x8x8xbf16>
    %90 = vector.shape_cast %89 : vector<1x8x8xbf16> to vector<8x8xbf16>
    %cst_42 = arith.constant dense<0.000000e+00> : vector<8x128xf32>
    %91 = tpu.matmul %90, %81, %cst_42 {dimension_numbers = #tpu.dot_dimension_numbers<[1], [0], [0], [1], [0, 0, 1, 1], [], []>} : vector<8x8xbf16>, vector<8x128xbf16>, vector<8x128xf32> -> vector<8x128xf32>
    %92 = arith.addf %88, %91 : vector<8x128xf32>
    %cst_43 = arith.constant dense<0.000000e+00> : vector<8xf32>
    %93 = vector.multi_reduction <add>, %92, %cst_43 [1] : vector<8x128xf32> to vector<8xf32>
    %94 = vector.shape_cast %93 : vector<8xf32> to vector<8x1xf32>
    %cst_44 = arith.constant 7.812500e-03 : f32
    %95 = vector.broadcast %cst_44 : f32 to vector<8x1xf32>
    %96 = arith.mulf %94, %95 : vector<8x1xf32>
    %97 = vector.broadcast %96 : vector<8x1xf32> to vector<8x128xf32>
    %98 = arith.subf %92, %97 : vector<8x128xf32>
    %99 = arith.mulf %98, %98 : vector<8x128xf32>
    %cst_45 = arith.constant dense<0.000000e+00> : vector<8xf32>
    %100 = vector.multi_reduction <add>, %99, %cst_45 [1] : vector<8x128xf32> to vector<8xf32>
    %101 = vector.shape_cast %100 : vector<8xf32> to vector<8x1xf32>
    %cst_46 = arith.constant 7.812500e-03 : f32
    %102 = vector.broadcast %cst_46 : f32 to vector<8x1xf32>
    %103 = arith.mulf %101, %102 : vector<8x1xf32>
    %c0_47 = arith.constant 0 : index
    %c0_48 = arith.constant 0 : index
    %104 = vector.load %arg5[%c0_47, %c0_48] : memref<8x1xf32, #tpu.memory_space<vmem>>, vector<8x1xf32>
    %cst_49 = arith.constant 9.99999974E-6 : f32
    %105 = vector.broadcast %cst_49 : f32 to vector<8x1xf32>
    %106 = arith.addf %103, %105 : vector<8x1xf32>
    %107 = math.rsqrt %106 : vector<8x1xf32>
    %108 = arith.mulf %104, %107 : vector<8x1xf32>
    %109 = vector.broadcast %108 : vector<8x1xf32> to vector<8x128xf32>
    %110 = arith.mulf %98, %109 : vector<8x128xf32>
    %c0_50 = arith.constant 0 : index
    %c0_51 = arith.constant 0 : index
    %111 = vector.load %arg6[%c0_50, %c0_51] : memref<8x1xf32, #tpu.memory_space<vmem>>, vector<8x1xf32>
    %112 = vector.broadcast %111 : vector<8x1xf32> to vector<8x128xf32>
    %113 = arith.addf %110, %112 : vector<8x128xf32>
    %c0_52 = arith.constant 0 : index
    %114 = memref.load %arg7[%c0_52] : memref<1xf32, #tpu.memory_space<smem>>
    %115 = vector.broadcast %114 : f32 to vector<8x128xf32>
    %116 = arith.mulf %21, %115 : vector<8x128xf32>
    %117 = arith.addf %113, %116 : vector<8x128xf32>
    %cst_53 = arith.constant 0.000000e+00 : f32
    %118 = vector.broadcast %cst_53 : f32 to vector<8x128xf32>
    %119 = arith.maximumf %117, %118 : vector<8x128xf32>
    %c0_54 = arith.constant 0 : index
    %c0_55 = arith.constant 0 : index
    %120 = vector.load %arg8[%c0_54, %c0_55] : memref<8x128xf32, #tpu.memory_space<vmem>>, vector<8x128xf32>
    tpu.vector_store %arg8[%c0_54, %c0_55], %119 {strides = array<i32>} : memref<8x128xf32, #tpu.memory_space<vmem>>, vector<8x128xf32>,
    return
  }
}

</mosaic_0001>

<llo_original>
// kernel: tpu_custom_call.1
$region0: #{tpu_custom_call.1}
  #allocation0 [shape = 'u32[]', space=smem, size = 0x4, offset = 0x4, fixed_abs, tag = 'smem constant byte address 0x4 - core index']
  #allocation1 [shape = 'u32[144,128]{1,0:T(1,128)}', space=vmem, size = 0x12000, scoped, tag = 'internal scratch']
  #allocation2 [shape = 'f32[1]{0:T(128)S(6)}', space=smem, size = 0x200, scoped, tag = 'scoped memory for tpu_custom_call.1']
  %s0 = inlined_call_operand.vmem [shape: f32[8,128], index: 0, kind: input, shape index: {}]
  %s1 = inlined_call_operand.vmem [shape: bf16[3,8,8], index: 1, kind: input, shape index: {}]
  %s2 = inlined_call_operand.vmem [shape: bf16[3,8,8], index: 2, kind: input, shape index: {}]
  %s3 = inlined_call_operand.vmem [shape: f32[8,1], index: 3, kind: input, shape index: {}]
  %s4 = inlined_call_operand.vmem [shape: f32[8,1], index: 4, kind: input, shape index: {}]
  %s5 = inlined_call_operand.vmem [shape: f32[8,1], index: 5, kind: input, shape index: {}]
  %s6 = inlined_call_operand.vmem [shape: f32[8,1], index: 6, kind: input, shape index: {}]
  %s7 = inlined_call_operand.<no memory space> [shape: f32[1], index: 7, kind: input, shape index: {}]
  %s8 = inlined_call_operand.hbm [shape: f32[8,128], index: 8, kind: output, shape index: {}]
  %s9 = sld [smem:[#allocation0]]
  $region42: #{tpu_custom_call.1} parent=0
    _
  %s11 = ssub.s32 1, %s9
  %s12 = scalar_select 0, %s11, %s9
  %13 = sst [smem:[#allocation2]] %s7
  $region1: #{tpu_custom_call.1} parent=0
    #allocation3 [shape = 'u8[4096]{0}', space=vmem, size = 0x1000, scoped, tag = 'output window, operand 0, single buffered']
    #allocation4 [shape = 's32[1]{0}', space=sflag, size = 0x4, scoped, tag = 'scoped memory for tpu_custom_call.1']
    %14 = vsyncpa [#allocation4], 0
    // Predicated region
    $region2: #{tpu_custom_call.1} parent=1 // pred_check
      _
    $region3: #{tpu_custom_call.1} parent=1 // pred_check_branch
      %16 = sbr.rel (0) target = $region5
    $region4: #{tpu_custom_call.1} parent=1 // pred_region
      _
    $region5: #{tpu_custom_call.1} parent=1 // pred_fallthru
      _
    // Predicated region
    $region6: #{tpu_custom_call.1} parent=1 // pred_check
      _
    $region7: #{tpu_custom_call.1} parent=1 // pred_check_branch
      %18 = sbr.rel (0) target = $region9
    $region8: #{tpu_custom_call.1} parent=1 // pred_region
      _
    $region9: #{tpu_custom_call.1} parent=1 // pred_fallthru
      _
    // Predicated region
    $region10: #{tpu_custom_call.1} parent=1 // pred_check
      _
    $region11: #{tpu_custom_call.1} parent=1 // pred_check_branch
      %20 = sbr.rel (0) target = $region13
    $region12: #{tpu_custom_call.1} parent=1 // pred_region
      _
    $region13: #{tpu_custom_call.1} parent=1 // pred_fallthru
      _
    // Predicated region
    $region14: #{tpu_custom_call.1} parent=1 // pred_check
      _
    $region15: #{tpu_custom_call.1} parent=1 // pred_check_branch
      %22 = sbr.rel (0) target = $region17
    $region16: #{tpu_custom_call.1} parent=1 // pred_region
      _
    $region17: #{tpu_custom_call.1} parent=1 // pred_fallthru
      _
    // Predicated region
    $region18: #{tpu_custom_call.1} parent=1 // pred_check
      _
    $region19: #{tpu_custom_call.1} parent=1 // pred_check_branch
      %24 = sbr.rel (0) target = $region21
    $region20: #{tpu_custom_call.1} parent=1 // pred_region
      _
    $region21: #{tpu_custom_call.1} parent=1 // pred_fallthru
      _
    // Predicated region
    $region22: #{tpu_custom_call.1} parent=1 // pred_check
      _
    $region23: #{tpu_custom_call.1} parent=1 // pred_check_branch
      %26 = sbr.rel (0) target = $region25
    $region24: #{tpu_custom_call.1} parent=1 // pred_region
      _
    $region25: #{tpu_custom_call.1} parent=1 // pred_fallthru
      _
    // Predicated region
    $region26: #{tpu_custom_call.1} parent=1 // pred_check
      _
    $region27: #{tpu_custom_call.1} parent=1 // pred_check_branch
      %28 = sbr.rel (0) target = $region29
    $region28: #{tpu_custom_call.1} parent=1 // pred_region
      _
    $region29: #{tpu_custom_call.1} parent=1 // pred_fallthru
      _
    // Predicated region
    $region30: #{tpu_custom_call.1} parent=1 // pred_check
      _
    $region31: #{tpu_custom_call.1} parent=1 // pred_check_branch
      %30 = sbr.rel (0) target = $region33
    $region32: #{tpu_custom_call.1} parent=1 // pred_region
      _
    $region33: #{tpu_custom_call.1} parent=1 // pred_fallthru
      _
    %v32 = vlaneseq
    %v33 = vand.u32 %v32, 127
    %vm34 = vcmp.lt.s32.totalorder %v33, 0
    %v35 = vsub.s32 0, %v33
    %v36 = vsel %vm34, %v35, %v33
    %v37 = vshrl.u32 %v36, 6
    %v38 = vand.u32 %v36, 63
    %v39 = vsub.s32 0, %v38
    %v40 = vsel %vm34, %v39, %v38
    %vm41 = vcmp.ne.s32.totalorder %v40, 0
    %vm42 = vcmp.lt.s32.totalorder %v40, 0
    %vm43 = vmand %vm42, %vm41
    %v44 = vadd.s32 %v40, 64
    %v45 = vsel %vm43, %v44, %v40
    %vm46 = vcmp.ne.s32.totalorder %v45, 0
    %vm47 = vcmp.ne.s32.totalorder %v45, 63
    %v48 = vld [vmem:[%s0] sm:$0xff]
    %49 = vrot.lane.b32.xlu0 %v48, 1
    %v50 = vpop.permute.xlu0 %49
    %v51 = vsel %vm46, 1, 0
    %vm52 = vcmp.eq.s32.totalorder %v51, 1
    %v53 = vsel %vm52, %v50, 0.0
    %54 = vrot.lane.b32.xlu0 %v48, 127
    %v55 = vpop.permute.xlu0 %54
    %v56 = vsel %vm47, 1, 0
    %vm57 = vcmp.eq.s32.totalorder %v56, 1
    %v58 = vsel %vm57, %v55, 0.0
    %v59 = vpack.c.bf16 %v53, %v53
    %v60 = vpack.c.bf16 %v48, %v48
    %v61 = vpack.c.bf16 %v58, %v58
    %v62 = vld [vmem:[%s1] sm:$0xf]
    %s63 = scalar_lea.vmem %s1, 4
    %v64 = vld [vmem:[%s63] sm:$0xf]
    %vm65 = vcmask 64512
    %v67 = vsel %vm65, %v64, 0
    %vm69 = vcmask 1043456
    %v71 = vsel %vm69, %v60, 0
    %73 = vmatprep.subr.bf16.mxu0 0
    %74 = vmatpush1.bf16.msra.mxu0 0
    %75 = vmatprep.subr.bf16.mxu0 0
    %76 = vmatpush1.bf16.msra.mxu0 0
    %77 = vmatprep.subr.bf16.mxu0 0
    %78 = vmatpush1.bf16.msra.mxu0 0
    %79 = vmatprep.subr.bf16.mxu0 0
    %80 = vmatpush1.bf16.msra.mxu0 0
    %81 = vmatprep.subr.bf16.mxu0 0
    %82 = vmatpush1.bf16.msra.mxu0 0
    %83 = vmatprep.subr.bf16.mxu0 0
    %84 = vmatpush1.bf16.msra.mxu0 0
    %85 = vmatprep.subr.bf16.mxu0 0
    %86 = vmatpush1.bf16.msra.mxu0 0
    %87 = vmatprep.subr.bf16.mxu0 0
    %88 = vmatpush1.bf16.msra.mxu0 %v71
    %89 = vmatprep.subr.bf16.mxu0 0
    %90 = vmatpush2.bf16.msra.mxu0 0
    %91 = vmatprep.subr.bf16.mxu0 0
    %92 = vmatpush2.bf16.msra.mxu0 0
    %93 = vmatprep.subr.bf16.mxu0 0
    %94 = vmatpush2.bf16.msra.mxu0 0
    %95 = vmatprep.subr.bf16.mxu0 0
    %96 = vmatpush2.bf16.msra.mxu0 0
    %97 = vmatprep.subr.bf16.mxu0 0
    %98 = vmatpush2.bf16.msra.mxu0 0
    %99 = vmatprep.subr.bf16.mxu0 0
    %100 = vmatpush2.bf16.msra.mxu0 0
    %101 = vmatprep.subr.bf16.mxu0 0
    %102 = vmatpush2.bf16.msra.mxu0 0
    %103 = vmatprep.subr.bf16.mxu0 0
    %104 = vmatpush2.bf16.msra.mxu0 0
    %105 = vmatprep.mubr.bf16.mxu0 0
    %106 = vmatmul.mubr.bf16.gmra.mxu0 %v67
    %v107 = vpop.f32.mrf.mxu0
    %v108 = vadd.f32 0.0, %v107
    %v109 = vpop.f32.mrf.mxu0
    %v110 = vpop.f32.mrf.mxu0
    %v111 = vpop.f32.mrf.mxu0
    %112 = vdwg.mxu0
    %v114 = vsel %vm65, %v62, 0
    %v117 = vsel %vm69, %v59, 0
    %119 = vmatprep.subr.bf16.mxu0 0
    %120 = vmatpush1.bf16.msra.mxu0 0
    %121 = vmatprep.subr.bf16.mxu0 0
    %122 = vmatpush1.bf16.msra.mxu0 0
    %123 = vmatprep.subr.bf16.mxu0 0
    %124 = vmatpush1.bf16.msra.mxu0 0
    %125 = vmatprep.subr.bf16.mxu0 0
    %126 = vmatpush1.bf16.msra.mxu0 0
    %127 = vmatprep.subr.bf16.mxu0 0
    %128 = vmatpush1.bf16.msra.mxu0 0
    %129 = vmatprep.subr.bf16.mxu0 0
    %130 = vmatpush1.bf16.msra.mxu0 0
    %131 = vmatprep.subr.bf16.mxu0 0
    %132 = vmatpush1.bf16.msra.mxu0 0
    %133 = vmatprep.subr.bf16.mxu0 0
    %134 = vmatpush1.bf16.msra.mxu0 %v117
    %135 = vmatprep.subr.bf16.mxu0 0
    %136 = vmatpush2.bf16.msra.mxu0 0
    %137 = vmatprep.subr.bf16.mxu0 0
    %138 = vmatpush2.bf16.msra.mxu0 0
    %139 = vmatprep.subr.bf16.mxu0 0
    %140 = vmatpush2.bf16.msra.mxu0 0
    %141 = vmatprep.subr.bf16.mxu0 0
    %142 = vmatpush2.bf16.msra.mxu0 0
    %143 = vmatprep.subr.bf16.mxu0 0
    %144 = vmatpush2.bf16.msra.mxu0 0
    %145 = vmatprep.subr.bf16.mxu0 0
    %146 = vmatpush2.bf16.msra.mxu0 0
    %147 = vmatprep.subr.bf16.mxu0 0
    %148 = vmatpush2.bf16.msra.mxu0 0
    %149 = vmatprep.subr.bf16.mxu0 0
    %150 = vmatpush2.bf16.msra.mxu0 0
    %151 = vmatprep.mubr.bf16.mxu0 0
    %152 = vmatmul.mubr.bf16.gmra.mxu0 %v114
    %v153 = vpop.f32.mrf.mxu0
    %v154 = vadd.f32 %v108, %v153
    %v155 = vpop.f32.mrf.mxu0
    %v156 = vpop.f32.mrf.mxu0
    %v157 = vpop.f32.mrf.mxu0
    %158 = vdwg.mxu0
    %s159 = scalar_lea.vmem %s1, 8
    %v160 = vld [vmem:[%s159] sm:$0xf]
    %v162 = vsel %vm65, %v160, 0
    %v165 = vsel %vm69, %v61, 0
    %167 = vmatprep.subr.bf16.mxu0 0
    %168 = vmatpush1.bf16.msra.mxu0 0
    %169 = vmatprep.subr.bf16.mxu0 0
    %170 = vmatpush1.bf16.msra.mxu0 0
    %171 = vmatprep.subr.bf16.mxu0 0
    %172 = vmatpush1.bf16.msra.mxu0 0
    %173 = vmatprep.subr.bf16.mxu0 0
    %174 = vmatpush1.bf16.msra.mxu0 0
    %175 = vmatprep.subr.bf16.mxu0 0
    %176 = vmatpush1.bf16.msra.mxu0 0
    %177 = vmatprep.subr.bf16.mxu0 0
    %178 = vmatpush1.bf16.msra.mxu0 0
    %179 = vmatprep.subr.bf16.mxu0 0
    %180 = vmatpush1.bf16.msra.mxu0 0
    %181 = vmatprep.subr.bf16.mxu0 0
    %182 = vmatpush1.bf16.msra.mxu0 %v165
    %183 = vmatprep.subr.bf16.mxu0 0
    %184 = vmatpush2.bf16.msra.mxu0 0
    %185 = vmatprep.subr.bf16.mxu0 0
    %186 = vmatpush2.bf16.msra.mxu0 0
    %187 = vmatprep.subr.bf16.mxu0 0
    %188 = vmatpush2.bf16.msra.mxu0 0
    %189 = vmatprep.subr.bf16.mxu0 0
    %190 = vmatpush2.bf16.msra.mxu0 0
    %191 = vmatprep.subr.bf16.mxu0 0
    %192 = vmatpush2.bf16.msra.mxu0 0
    %193 = vmatprep.subr.bf16.mxu0 0
    %194 = vmatpush2.bf16.msra.mxu0 0
    %195 = vmatprep.subr.bf16.mxu0 0
    %196 = vmatpush2.bf16.msra.mxu0 0
    %197 = vmatprep.subr.bf16.mxu0 0
    %198 = vmatpush2.bf16.msra.mxu0 0
    %199 = vmatprep.mubr.bf16.mxu0 0
    %200 = vmatmul.mubr.bf16.gmra.mxu0 %v162
    %v201 = vpop.f32.mrf.mxu0
    %v202 = vadd.f32 0.0, %v201
    %v203 = vpop.f32.mrf.mxu0
    %v204 = vpop.f32.mrf.mxu0
    %v205 = vpop.f32.mrf.mxu0
    %206 = vdwg.mxu0
    %v207 = vadd.f32 %v154, %v202
    %208 = vadd.xlane.f32.xlu0 %v207
    %v209 = vpop.xlane.xlu0 %208
    %v210 = vmul.f32 %v209, 0.0078125
    %v211 = vsub.f32 %v207, %v210
    %v212 = vmul.f32 %v211, %v211
    %213 = vadd.xlane.f32.xlu0 %v212
    %v214 = vpop.xlane.xlu0 %213
    %v215 = vmul.f32 %v214, 0.0078125
    %v216 = vld [vmem:[%s3] sm:$0xff]
    %v217 = vadd.f32 %v215, 1e-05
    %v218 = vrsqrt.pop %v217
    %v219 = vmul.f32 %v216, %v218
    %221 = vset.pattern.permute.xlu0 0
    %222 = vperm.xlu0 %221, %v219
    %v223 = vpop.permute.xlu0 %222
    %v225 = vmul.f32 %v211, %v223
    %v226 = vld [vmem:[%s4] sm:$0xff]
    %228 = vset.pattern.permute.xlu0 0
    %229 = vperm.xlu0 %228, %v226
    %v230 = vpop.permute.xlu0 %229
    %v232 = vadd.f32 %v225, %v230
    %v233 = vmax.f32 %v232, 0.0
    %234 = vrot.lane.b32.xlu0 %v233, 1
    %v235 = vpop.permute.xlu0 %234
    %v236 = vsel %vm52, %v235, 0.0
    %237 = vrot.lane.b32.xlu0 %v233, 127
    %v238 = vpop.permute.xlu0 %237
    %v239 = vsel %vm57, %v238, 0.0
    %v240 = vpack.c.bf16 %v236, %v236
    %v241 = vpack.c.bf16 %v233, %v233
    %v242 = vpack.c.bf16 %v239, %v239
    %v243 = vld [vmem:[%s2] sm:$0xf]
    %s244 = scalar_lea.vmem %s2, 4
    %v245 = vld [vmem:[%s244] sm:$0xf]
    %v247 = vsel %vm65, %v245, 0
    %v250 = vsel %vm69, %v241, 0
    %252 = vmatprep.subr.bf16.mxu0 0
    %253 = vmatpush1.bf16.msra.mxu0 0
    %254 = vmatprep.subr.bf16.mxu0 0
    %255 = vmatpush1.bf16.msra.mxu0 0
    %256 = vmatprep.subr.bf16.mxu0 0
    %257 = vmatpush1.bf16.msra.mxu0 0
    %258 = vmatprep.subr.bf16.mxu0 0
    %259 = vmatpush1.bf16.msra.mxu0 0
    %260 = vmatprep.subr.bf16.mxu0 0
    %261 = vmatpush1.bf16.msra.mxu0 0
    %262 = vmatprep.subr.bf16.mxu0 0
    %263 = vmatpush1.bf16.msra.mxu0 0
    %264 = vmatprep.subr.bf16.mxu0 0
    %265 = vmatpush1.bf16.msra.mxu0 0
    %266 = vmatprep.subr.bf16.mxu0 0
    %267 = vmatpush1.bf16.msra.mxu0 %v250
    %268 = vmatprep.subr.bf16.mxu0 0
    %269 = vmatpush2.bf16.msra.mxu0 0
    %270 = vmatprep.subr.bf16.mxu0 0
    %271 = vmatpush2.bf16.msra.mxu0 0
    %272 = vmatprep.subr.bf16.mxu0 0
    %273 = vmatpush2.bf16.msra.mxu0 0
    %274 = vmatprep.subr.bf16.mxu0 0
    %275 = vmatpush2.bf16.msra.mxu0 0
    %276 = vmatprep.subr.bf16.mxu0 0
    %277 = vmatpush2.bf16.msra.mxu0 0
    %278 = vmatprep.subr.bf16.mxu0 0
    %279 = vmatpush2.bf16.msra.mxu0 0
    %280 = vmatprep.subr.bf16.mxu0 0
    %281 = vmatpush2.bf16.msra.mxu0 0
    %282 = vmatprep.subr.bf16.mxu0 0
    %283 = vmatpush2.bf16.msra.mxu0 0
    %284 = vmatprep.mubr.bf16.mxu0 0
    %285 = vmatmul.mubr.bf16.gmra.mxu0 %v247
    %v286 = vpop.f32.mrf.mxu0
    %v287 = vadd.f32 0.0, %v286
    %v288 = vpop.f32.mrf.mxu0
    %v289 = vpop.f32.mrf.mxu0
    %v290 = vpop.f32.mrf.mxu0
    %291 = vdwg.mxu0
    %v293 = vsel %vm65, %v243, 0
    %v296 = vsel %vm69, %v240, 0
    %298 = vmatprep.subr.bf16.mxu0 0
    %299 = vmatpush1.bf16.msra.mxu0 0
    %300 = vmatprep.subr.bf16.mxu0 0
    %301 = vmatpush1.bf16.msra.mxu0 0
    %302 = vmatprep.subr.bf16.mxu0 0
    %303 = vmatpush1.bf16.msra.mxu0 0
    %304 = vmatprep.subr.bf16.mxu0 0
    %305 = vmatpush1.bf16.msra.mxu0 0
    %306 = vmatprep.subr.bf16.mxu0 0
    %307 = vmatpush1.bf16.msra.mxu0 0
    %308 = vmatprep.subr.bf16.mxu0 0
    %309 = vmatpush1.bf16.msra.mxu0 0
    %310 = vmatprep.subr.bf16.mxu0 0
    %311 = vmatpush1.bf16.msra.mxu0 0
    %312 = vmatprep.subr.bf16.mxu0 0
    %313 = vmatpush1.bf16.msra.mxu0 %v296
    %314 = vmatprep.subr.bf16.mxu0 0
    %315 = vmatpush2.bf16.msra.mxu0 0
    %316 = vmatprep.subr.bf16.mxu0 0
    %317 = vmatpush2.bf16.msra.mxu0 0
    %318 = vmatprep.subr.bf16.mxu0 0
    %319 = vmatpush2.bf16.msra.mxu0 0
    %320 = vmatprep.subr.bf16.mxu0 0
    %321 = vmatpush2.bf16.msra.mxu0 0
    %322 = vmatprep.subr.bf16.mxu0 0
    %323 = vmatpush2.bf16.msra.mxu0 0
    %324 = vmatprep.subr.bf16.mxu0 0
    %325 = vmatpush2.bf16.msra.mxu0 0
    %326 = vmatprep.subr.bf16.mxu0 0
    %327 = vmatpush2.bf16.msra.mxu0 0
    %328 = vmatprep.subr.bf16.mxu0 0
    %329 = vmatpush2.bf16.msra.mxu0 0
    %330 = vmatprep.mubr.bf16.mxu0 0
    %331 = vmatmul.mubr.bf16.gmra.mxu0 %v293
    %v332 = vpop.f32.mrf.mxu0
    %v333 = vadd.f32 %v287, %v332
    %v334 = vpop.f32.mrf.mxu0
    %v335 = vpop.f32.mrf.mxu0
    %v336 = vpop.f32.mrf.mxu0
    %337 = vdwg.mxu0
    %s338 = scalar_lea.vmem %s2, 8
    %v339 = vld [vmem:[%s338] sm:$0xf]
    %v341 = vsel %vm65, %v339, 0
    %v344 = vsel %vm69, %v242, 0
    %346 = vmatprep.subr.bf16.mxu0 0
    %347 = vmatpush1.bf16.msra.mxu0 0
    %348 = vmatprep.subr.bf16.mxu0 0
    %349 = vmatpush1.bf16.msra.mxu0 0
    %350 = vmatprep.subr.bf16.mxu0 0
    %351 = vmatpush1.bf16.msra.mxu0 0
    %352 = vmatprep.subr.bf16.mxu0 0
    %353 = vmatpush1.bf16.msra.mxu0 0
    %354 = vmatprep.subr.bf16.mxu0 0
    %355 = vmatpush1.bf16.msra.mxu0 0
    %356 = vmatprep.subr.bf16.mxu0 0
    %357 = vmatpush1.bf16.msra.mxu0 0
    %358 = vmatprep.subr.bf16.mxu0 0
    %359 = vmatpush1.bf16.msra.mxu0 0
    %360 = vmatprep.subr.bf16.mxu0 0
    %361 = vmatpush1.bf16.msra.mxu0 %v344
    %362 = vmatprep.subr.bf16.mxu0 0
    %363 = vmatpush2.bf16.msra.mxu0 0
    %364 = vmatprep.subr.bf16.mxu0 0
    %365 = vmatpush2.bf16.msra.mxu0 0
    %366 = vmatprep.subr.bf16.mxu0 0
    %367 = vmatpush2.bf16.msra.mxu0 0
    %368 = vmatprep.subr.bf16.mxu0 0
    %369 = vmatpush2.bf16.msra.mxu0 0
    %370 = vmatprep.subr.bf16.mxu0 0
    %371 = vmatpush2.bf16.msra.mxu0 0
    %372 = vmatprep.subr.bf16.mxu0 0
    %373 = vmatpush2.bf16.msra.mxu0 0
    %374 = vmatprep.subr.bf16.mxu0 0
    %375 = vmatpush2.bf16.msra.mxu0 0
    %376 = vmatprep.subr.bf16.mxu0 0
    %377 = vmatpush2.bf16.msra.mxu0 0
    %378 = vmatprep.mubr.bf16.mxu0 0
    %379 = vmatmul.mubr.bf16.gmra.mxu0 %v341
    %v380 = vpop.f32.mrf.mxu0
    %v381 = vadd.f32 0.0, %v380
    %v382 = vpop.f32.mrf.mxu0
    %v383 = vpop.f32.mrf.mxu0
    %v384 = vpop.f32.mrf.mxu0
    %385 = vdwg.mxu0
    %v386 = vadd.f32 %v333, %v381
    %387 = vadd.xlane.f32.xlu0 %v386
    %v388 = vpop.xlane.xlu0 %387
    %v389 = vmul.f32 %v388, 0.0078125
    %v390 = vsub.f32 %v386, %v389
    %v391 = vmul.f32 %v390, %v390
    %392 = vadd.xlane.f32.xlu0 %v391
    %v393 = vpop.xlane.xlu0 %392
    %v394 = vmul.f32 %v393, 0.0078125
    %v395 = vld [vmem:[%s5] sm:$0xff]
    %v396 = vadd.f32 %v394, 1e-05
    %v397 = vrsqrt.pop %v396
    %v398 = vmul.f32 %v395, %v397
    %400 = vset.pattern.permute.xlu0 0
    %401 = vperm.xlu0 %400, %v398
    %v402 = vpop.permute.xlu0 %401
    %v404 = vmul.f32 %v390, %v402
    %v405 = vld [vmem:[%s6] sm:$0xff]
    %407 = vset.pattern.permute.xlu0 0
    %408 = vperm.xlu0 %407, %v405
    %v409 = vpop.permute.xlu0 %408
    %v411 = vadd.f32 %v404, %v409
    %s412 = sld [smem:[#allocation2]]
    %v413 = vstv %s412
    %v414 = vmul.f32 %v48, %v413
    %v415 = vadd.f32 %v411, %v414
    %v416 = vmax.f32 %v415, 0.0
    %417 = vst [vmem:[#allocation3] sm:$0xff] %v416
    // Predicated region
    $region34: #{tpu_custom_call.1} parent=1 // pred_check
      _
    $region35: #{tpu_custom_call.1} parent=1 // pred_check_branch
      %419 = sbr.rel (0) target = $region37
    $region36: #{tpu_custom_call.1} parent=1 // pred_region
      %s421 = ssub.s32 128, 128
      %422 = vsyncadd [#allocation4], %s421
      %s424 = sshll.u32 [#allocation3], 4
      %s425 = int_to_ptr.vmem [resolvable:$true] %s424
      %427 = dma.vmem_to_hbm [thread:$0]  %s425, 128, %s8, [#allocation4]
    $region37: #{tpu_custom_call.1} parent=1 // pred_fallthru
      _
    // Predicated region
    $region38: #{tpu_custom_call.1} parent=1 // pred_check
      _
    $region39: #{tpu_custom_call.1} parent=1 // pred_check_branch
      %429 = sbr.rel (0) target = $region41
    $region40: #{tpu_custom_call.1} parent=1 // pred_region
      %430 = dma.done [#allocation4], 128
    $region41: #{tpu_custom_call.1} parent=1 // pred_fallthru
      _
    %431 = vsyncpa [#allocation4], 1

</llo_original>
